<compile_context>
chip_gen: v6e
topology: v6e:2x2x1
jax: 0.10.0
libtpu: 0.0.40
codegen_flags: <defaults>
</compile_context>

<pallas_src>
import numpy as np

import jax
import jax.numpy as jnp
from jax.experimental import pallas as pl
from jax.experimental.pallas import tpu as pltpu


def _round_up(x, m):
    return ((x + m - 1) // m) * m


def _adaptive_swarm_kernel(x_ref, wt_ref, b_ref, mask_ref, o_ref):
    """x_ref: (TB, Fp); wt_ref: (Fp, Np); b_ref/mask_ref: (1, Np); o_ref: (TB, Np)."""
    x = x_ref[...]
    wt = wt_ref[...]
    b = b_ref[...]
    mask = mask_ref[...] != 0.0          # (1, Np) bool; broadcasts over rows

    # Linear layer on the MXU (f32 accumulation), fused with the cross-swarm softmax.
    y = jnp.dot(x, wt, preferred_element_type=jnp.float32) + b

    # Masked, numerically-stable softmax across the M weight-logit columns.
    logits = jnp.where(mask, y, -jnp.inf)
    m = jnp.max(logits, axis=1, keepdims=True)          # (TB, 1)  XLU reduce
    # exp argument is 0 on non-logit columns -> finite, discarded by the final select.
    p = jnp.exp(jnp.where(mask, y - m, 0.0))            # EUP
    s = jnp.sum(jnp.where(mask, p, 0.0), axis=1, keepdims=True)
    inv = pl.reciprocal(s, approx=False)                # exact, keeps 1e-5 tolerance

    o_ref[...] = jnp.where(mask, p * inv, y).astype(o_ref.dtype)


def prepare_adaptive_swarm_params(weight, bias, *, M, dim_out, param_dtype=jnp.float32):
    """Pad + transpose the Linear parameters ONCE (call at parameter-setup time).

    weight: ((dim_out+1)*M, dim_fea) PyTorch Linear layout; bias: ((dim_out+1)*M,).
    Returns (wt, b2, mask) with wt: (Fp, Np), b2/mask: (1, Np).
    """
    N, F = weight.shape
    D1 = dim_out + 1
    assert N == D1 * M and bias.shape == (N,)
    Fp = _round_up(F, 128)
    Np = _round_up(N, 128)

    wt = jnp.zeros((Fp, Np), param_dtype).at[:F, :N].set(
        jnp.transpose(weight).astype(param_dtype))
    b2 = jnp.zeros((1, Np), jnp.float32).at[:, :N].set(
        bias.reshape(1, N).astype(jnp.float32))

    # Per-swarm weight-logit columns, passed as a float32 input (NOT a captured constant).
    mask_np = np.zeros((1, Np), dtype=np.float32)
    mask_np[0, np.arange(M) * D1 + dim_out] = 1.0
    mask = jnp.asarray(mask_np)
    return wt, b2, mask


def adaptive_swarm_apply(x, wt, b2, mask, *, N, block_b=1024, out_dtype=None):
    """x: (B, dim_fea); wt/b2/mask from prepare_adaptive_swarm_params. Returns (B, N)."""
    B, F = x.shape
    Fp, Np = wt.shape
    compute_dtype = wt.dtype
    out_dtype = out_dtype or x.dtype

    in_bytes = jnp.dtype(compute_dtype).itemsize
    out_bytes = jnp.dtype(out_dtype).itemsize

    # --- Batch tile selection ---
    # (a) >=2 grid steps when B allows, so ("parallel",) shards across v7x's 2 TCs.
    tb_split = _round_up(max(1, (B + 1) // 2), 8)
    # (b) VMEM budget: double-buffered x + out blocks, plus weight / bias / mask.
    vmem_budget = 24 * 1024 * 1024
    fixed = 2 * Fp * Np * in_bytes + 4 * Np * 4
    per_row = 2 * (Fp * in_bytes + Np * out_bytes)
    tb_vmem = max(8, ((vmem_budget - fixed) // max(per_row, 1)) // 8 * 8)
    TB = max(8, min(_round_up(block_b, 8), tb_split, tb_vmem))
    Bp = _round_up(B, TB)

    # Pad x on batch (multiple of TB) and feature (lane-dense, tile-aligned K) axes.
    xp = x.astype(compute_dtype)
    if Bp != B or Fp != F:
        xp = jnp.zeros((Bp, Fp), compute_dtype).at[:B, :F].set(xp)

    out = pl.pallas_call(
        _adaptive_swarm_kernel,
        out_shape=jax.ShapeDtypeStruct((Bp, Np), out_dtype),
        grid=(Bp // TB,),
        in_specs=[
            pl.BlockSpec((TB, Fp), lambda i: (i, 0)),
            pl.BlockSpec((Fp, Np), lambda i: (0, 0)),   # constant block: fetched once
            pl.BlockSpec((1, Np), lambda i: (0, 0)),
            pl.BlockSpec((1, Np), lambda i: (0, 0)),
        ],
        out_specs=pl.BlockSpec((TB, Np), lambda i: (i, 0)),
        compiler_params=pltpu.CompilerParams(
            dimension_semantics=("parallel",),
            vmem_limit_bytes=48 * 1024 * 1024,
        ),
    )(xp, wt, b2, mask)

    # Slice off batch / lane padding. (When N << 128 the padded writeback costs Np/N x
    # extra HBM bytes; an unpadded (TB, N) out_spec is a per-shape benchmark trade-off.)
    return out[:B, :N]


def adaptive_swarm_forward(x, weight, bias, *, M, dim_out, block_b=1024, compute_dtype=None):
    """Convenience wrapper. For repeated calls, hoist prepare_adaptive_swarm_params."""
    compute_dtype = compute_dtype or x.dtype  # pass jnp.bfloat16 to halve x/weight traffic
    wt, b2, mask = prepare_adaptive_swarm_params(
        weight, bias, M=M, dim_out=dim_out, param_dtype=compute_dtype)
    return adaptive_swarm_apply(x, wt, b2, mask, N=(dim_out + 1) * M, block_b=block_b)


def adaptive_swarm_reference(x, weight, bias, *, M, dim_out):
    """Pure-JAX reference mirroring the PyTorch forward."""
    B = x.shape[0]
    D1 = dim_out + 1
    hypos = x @ weight.T + bias                       # (B, N)
    hyM = hypos.reshape(B, M, D1)
    w = jax.nn.softmax(hyM[:, :, -1], axis=1)         # softmax over M (dim=1)
    hyM = hyM.at[:, :, -1].set(w)
    return hyM.reshape(B, -1)


if __name__ == "__main__":
    # Small shapes consistent with the module.
    B, dim_fea, dim_out, M = 8, 32, 7, 4
    N = (dim_out + 1) * M

    key = jax.random.PRNGKey(0)
    kx, kw, kb = jax.random.split(key, 3)

    x = jax.random.normal(kx, (B, dim_fea), dtype=jnp.float32)

    # Deterministic Linear init (uniform +-1/sqrt(fan_in), like nn.Linear).
    bound = 1.0 / (dim_fea ** 0.5)
    weight = jax.random.uniform(kw, (N, dim_fea), minval=-bound, maxval=bound, dtype=jnp.float32)
    bias = jax.random.uniform(kb, (N,), minval=-bound, maxval=bound, dtype=jnp.float32)

    out = adaptive_swarm_forward(x, weight, bias, M=M, dim_out=dim_out)
    out = jax.block_until_ready(out)

    ref = adaptive_swarm_reference(x, weight, bias, M=M, dim_out=dim_out)
    assert out.shape == (B, N)
    assert jnp.allclose(out, ref, atol=1e-5, rtol=1e-5), "Pallas kernel mismatch vs reference"

    print("KERNEL_OK")
</pallas_src>

<mosaic_0001>
module attributes {stable_mosaic.version = 11 : i64} {
  func.func @_adaptive_swarm_kernel(%arg0: i32, %arg1: memref<8x128xf32, #tpu.memory_space<vmem>>, %arg2: memref<128x128xf32, #tpu.memory_space<vmem>>, %arg3: memref<1x128xf32, #tpu.memory_space<vmem>>, %arg4: memref<1x128xf32, #tpu.memory_space<vmem>>, %arg5: memref<8x128xf32, #tpu.memory_space<vmem>>) attributes {dimension_semantics = [#tpu.dimension_semantics<parallel>], iteration_bounds = array<i64: 1>, scalar_prefetch = 0 : i64, scratch_operands = 0 : i64, tpu.core_type = #tpu.core_type<tc>, window_params = [{transform_indices = @transform_0, window_bounds = array<i64: 8, 128>}, {pipeline_mode = #tpu.pipeline_mode<synchronous>, transform_indices = @transform_1, window_bounds = array<i64: 128, 128>}, {pipeline_mode = #tpu.pipeline_mode<synchronous>, transform_indices = @transform_2, window_bounds = array<i64: 1, 128>}, {pipeline_mode = #tpu.pipeline_mode<synchronous>, transform_indices = @transform_3, window_bounds = array<i64: 1, 128>}, {transform_indices = @transform_4, window_bounds = array<i64: 8, 128>}]} {
    %c0 = arith.constant 0 : index
    %c0_0 = arith.constant 0 : index
    %0 = vector.load %arg1[%c0, %c0_0] : memref<8x128xf32, #tpu.memory_space<vmem>>, vector<8x128xf32>
    %c0_1 = arith.constant 0 : index
    %c0_2 = arith.constant 0 : index
    %1 = vector.load %arg2[%c0_1, %c0_2] : memref<128x128xf32, #tpu.memory_space<vmem>>, vector<128x128xf32>
    %c0_3 = arith.constant 0 : index
    %c0_4 = arith.constant 0 : index
    %2 = vector.load %arg3[%c0_3, %c0_4] : memref<1x128xf32, #tpu.memory_space<vmem>>, vector<1x128xf32>
    %c0_5 = arith.constant 0 : index
    %c0_6 = arith.constant 0 : index
    %3 = vector.load %arg4[%c0_5, %c0_6] : memref<1x128xf32, #tpu.memory_space<vmem>>, vector<1x128xf32>
    %cst = arith.constant 0.000000e+00 : f32
    %4 = vector.broadcast %cst : f32 to vector<1x128xf32>
    %5 = arith.cmpf one, %3, %4 : vector<1x128xf32>
    %cst_7 = arith.constant dense<0.000000e+00> : vector<8x128xf32>
    %6 = tpu.matmul %0, %1, %cst_7 {dimension_numbers = #tpu.dot_dimension_numbers<[1], [0], [0], [1], [0, 0, 1, 1], [], []>} : vector<8x128xf32>, vector<128x128xf32>, vector<8x128xf32> -> vector<8x128xf32>
    %7 = vector.broadcast %2 : vector<1x128xf32> to vector<8x128xf32>
    %8 = arith.addf %6, %7 : vector<8x128xf32>
    %cst_8 = arith.constant 0xFF800000 : f32
    %9 = vector.shape_cast %5 : vector<1x128xi1> to vector<1x128xi1>
    %10 = vector.broadcast %9 : vector<1x128xi1> to vector<8x128xi1>
    %11 = vector.broadcast %cst_8 : f32 to vector<8x128xf32>
    %12 = arith.select %10, %8, %11 : vector<8x128xi1>, vector<8x128xf32>
    %cst_9 = arith.constant dense<0xFF800000> : vector<8xf32>
    %13 = vector.multi_reduction <maximumf>, %12, %cst_9 [1] : vector<8x128xf32> to vector<8xf32>
    %14 = vector.shape_cast %13 : vector<8xf32> to vector<8x1xf32>
    %15 = vector.broadcast %14 : vector<8x1xf32> to vector<8x128xf32>
    %16 = arith.subf %8, %15 : vector<8x128xf32>
    %cst_10 = arith.constant 0.000000e+00 : f32
    %17 = vector.shape_cast %5 : vector<1x128xi1> to vector<1x128xi1>
    %18 = vector.broadcast %17 : vector<1x128xi1> to vector<8x128xi1>
    %19 = vector.broadcast %cst_10 : f32 to vector<8x128xf32>
    %20 = arith.select %18, %16, %19 : vector<8x128xi1>, vector<8x128xf32>
    %21 = math.exp %20 : vector<8x128xf32>
    %cst_11 = arith.constant 0.000000e+00 : f32
    %22 = vector.shape_cast %5 : vector<1x128xi1> to vector<1x128xi1>
    %23 = vector.broadcast %22 : vector<1x128xi1> to vector<8x128xi1>
    %24 = vector.broadcast %cst_11 : f32 to vector<8x128xf32>
    %25 = arith.select %23, %21, %24 : vector<8x128xi1>, vector<8x128xf32>
    %cst_12 = arith.constant dense<0.000000e+00> : vector<8xf32>
    %26 = vector.multi_reduction <add>, %25, %cst_12 [1] : vector<8x128xf32> to vector<8xf32>
    %27 = vector.shape_cast %26 : vector<8xf32> to vector<8x1xf32>
    %28 = tpu.reciprocal %27 : vector<8x1xf32> -> vector<8x1xf32>
    %29 = vector.broadcast %28 : vector<8x1xf32> to vector<8x128xf32>
    %30 = arith.mulf %21, %29 : vector<8x128xf32>
    %31 = vector.shape_cast %5 : vector<1x128xi1> to vector<1x128xi1>
    %32 = vector.broadcast %31 : vector<1x128xi1> to vector<8x128xi1>
    %33 = arith.select %32, %30, %8 : vector<8x128xi1>, vector<8x128xf32>
    %c0_13 = arith.constant 0 : index
    %c0_14 = arith.constant 0 : index
    %34 = vector.load %arg5[%c0_13, %c0_14] : memref<8x128xf32, #tpu.memory_space<vmem>>, vector<8x128xf32>
    tpu.vector_store %arg5[%c0_13, %c0_14], %33 {strides = array<i32>} : memref<8x128xf32, #tpu.memory_space<vmem>>, vector<8x128xf32>,
    return
  }
  func.func @transform_0(%arg0: i32) -> (i32, i32) {
    %c0_i32 = arith.constant 0 : i32
    %c0_i32_0 = arith.constant 0 : i32
    return %arg0, %c0_i32 : i32, i32
  }
  func.func @transform_1(%arg0: i32) -> (i32, i32) {
    %c0_i32 = arith.constant 0 : i32
    %c0_i32_0 = arith.constant 0 : i32
    %c0_i32_1 = arith.constant 0 : i32
    return %c0_i32, %c0_i32_0 : i32, i32
  }
  func.func @transform_2(%arg0: i32) -> (i32, i32) {
    %c0_i32 = arith.constant 0 : i32
    %c0_i32_0 = arith.constant 0 : i32
    %c0_i32_1 = arith.constant 0 : i32
    return %c0_i32, %c0_i32_0 : i32, i32
  }
  func.func @transform_3(%arg0: i32) -> (i32, i32) {
    %c0_i32 = arith.constant 0 : i32
    %c0_i32_0 = arith.constant 0 : i32
    %c0_i32_1 = arith.constant 0 : i32
    return %c0_i32, %c0_i32_0 : i32, i32
  }
  func.func @transform_4(%arg0: i32) -> (i32, i32) {
    %c0_i32 = arith.constant 0 : i32
    %c0_i32_0 = arith.constant 0 : i32
    return %arg0, %c0_i32 : i32, i32
  }
}

</mosaic_0001>

<llo_original>
// kernel: tpu_custom_call.1
$region0: #{tpu_custom_call.1}
  #allocation0 [shape = 'u32[]', space=smem, size = 0x4, offset = 0x4, fixed_abs, tag = 'smem constant byte address 0x4 - core index']
  #allocation1 [shape = 'u32[144,128]{1,0:T(1,128)}', space=vmem, size = 0x12000, scoped, tag = 'internal scratch']
  %s0 = inlined_call_operand.hbm [shape: f32[8,128], index: 0, kind: input, shape index: {}]
  %s1 = inlined_call_operand.hbm [shape: f32[128,128], index: 1, kind: input, shape index: {}]
  %s2 = inlined_call_operand.vmem [shape: f32[1,128], index: 2, kind: input, shape index: {}]
  %s3 = inlined_call_operand.vmem [shape: f32[1,128], index: 3, kind: input, shape index: {}]
  %s4 = inlined_call_operand.hbm [shape: f32[8,128], index: 4, kind: output, shape index: {}]
  %s5 = sld [smem:[#allocation0]]
  $region34: #{tpu_custom_call.1} parent=0
    _
  %s7 = ssub.s32 1, %s5
  %s8 = scalar_select 0, %s7, %s5
  $region1: #{tpu_custom_call.1} parent=0
    #allocation2 [shape = 'u8[4096]{0}', space=vmem, size = 0x1000, scoped, tag = 'input window, operand 0, single buffered']
    #allocation3 [shape = 's32[1]{0}', space=sflag, size = 0x4, scoped, tag = 'scoped memory for tpu_custom_call.1']
    #allocation4 [shape = 's32[1]{0}', space=sflag, size = 0x4, scoped, tag = 'scoped memory for tpu_custom_call.1']
    #allocation5 [shape = 'u8[65536]{0}', space=vmem, size = 0x10000, scoped, tag = 'input window, operand 1, single buffered']
    #allocation6 [shape = 's32[1]{0}', space=sflag, size = 0x4, scoped, tag = 'scoped memory for tpu_custom_call.1']
    #allocation7 [shape = 'u8[4096]{0}', space=vmem, size = 0x1000, scoped, tag = 'output window, operand 0, single buffered']
    %9 = vsyncpa [#allocation3], 0
    %10 = vsyncpa [#allocation6], 0
    %11 = vsyncpa [#allocation4], 0
    // Predicated region
    $region2: #{tpu_custom_call.1} parent=1 // pred_check
      _
    $region3: #{tpu_custom_call.1} parent=1 // pred_check_branch
      %13 = sbr.rel (0) target = $region5
    $region4: #{tpu_custom_call.1} parent=1 // pred_region
      %s15 = ssub.s32 128, 128
      %16 = vsyncadd [#allocation3], %s15
      %s18 = sshll.u32 [#allocation2], 4
      %s19 = int_to_ptr.vmem [resolvable:$true] %s18
      %21 = dma.hbm_to_vmem [thread:$0]  %s0, 128, %s19, [#allocation3]
    $region5: #{tpu_custom_call.1} parent=1 // pred_fallthru
      _
    // Predicated region
    $region6: #{tpu_custom_call.1} parent=1 // pred_check
      _
    $region7: #{tpu_custom_call.1} parent=1 // pred_check_branch
      %23 = sbr.rel (0) target = $region9
    $region8: #{tpu_custom_call.1} parent=1 // pred_region
      %s25 = ssub.s32 2048, 2048
      %26 = vsyncadd [#allocation6], %s25
      %s27 = sshll.u32 [#allocation5], 4
      %s28 = int_to_ptr.vmem [resolvable:$true] %s27
      %33 = dma.hbm_to_vmem [thread:$0]  %s1, 2048, %s28, [#allocation6], 128, 128, 8
    $region9: #{tpu_custom_call.1} parent=1 // pred_fallthru
      _
    // Predicated region
    $region10: #{tpu_custom_call.1} parent=1 // pred_check
      _
    $region11: #{tpu_custom_call.1} parent=1 // pred_check_branch
      %35 = sbr.rel (0) target = $region13
    $region12: #{tpu_custom_call.1} parent=1 // pred_region
      _
    $region13: #{tpu_custom_call.1} parent=1 // pred_fallthru
      _
    // Predicated region
    $region14: #{tpu_custom_call.1} parent=1 // pred_check
      _
    $region15: #{tpu_custom_call.1} parent=1 // pred_check_branch
      %37 = sbr.rel (0) target = $region17
    $region16: #{tpu_custom_call.1} parent=1 // pred_region
      _
    $region17: #{tpu_custom_call.1} parent=1 // pred_fallthru
      _
    // Predicated region
    $region18: #{tpu_custom_call.1} parent=1 // pred_check
      _
    $region19: #{tpu_custom_call.1} parent=1 // pred_check_branch
      %39 = sbr.rel (0) target = $region21
    $region20: #{tpu_custom_call.1} parent=1 // pred_region
      %40 = dma.done [#allocation3], 128
    $region21: #{tpu_custom_call.1} parent=1 // pred_fallthru
      _
    // Predicated region
    $region22: #{tpu_custom_call.1} parent=1 // pred_check
      _
    $region23: #{tpu_custom_call.1} parent=1 // pred_check_branch
      %42 = sbr.rel (0) target = $region25
    $region24: #{tpu_custom_call.1} parent=1 // pred_region
      %43 = dma.done [#allocation6], 2048
    $region25: #{tpu_custom_call.1} parent=1 // pred_fallthru
      _
    %v44 = vld [vmem:[#allocation2] sm:$0xff]
    %v45 = vld [vmem:[#allocation5] sm:$0xff]
    %v46 = vld [vmem:[#allocation5 + $0x8] sm:$0xff]
    %v47 = vld [vmem:[#allocation5 + $0x10] sm:$0xff]
    %v48 = vld [vmem:[#allocation5 + $0x18] sm:$0xff]
    %v49 = vld [vmem:[#allocation5 + $0x20] sm:$0xff]
    %v50 = vld [vmem:[#allocation5 + $0x28] sm:$0xff]
    %v51 = vld [vmem:[#allocation5 + $0x30] sm:$0xff]
    %v52 = vld [vmem:[#allocation5 + $0x38] sm:$0xff]
    %v53 = vld [vmem:[#allocation5 + $0x40] sm:$0xff]
    %v54 = vld [vmem:[#allocation5 + $0x48] sm:$0xff]
    %v55 = vld [vmem:[#allocation5 + $0x50] sm:$0xff]
    %v56 = vld [vmem:[#allocation5 + $0x58] sm:$0xff]
    %v57 = vld [vmem:[#allocation5 + $0x60] sm:$0xff]
    %v58 = vld [vmem:[#allocation5 + $0x68] sm:$0xff]
    %v59 = vld [vmem:[#allocation5 + $0x70] sm:$0xff]
    %v60 = vld [vmem:[#allocation5 + $0x78] sm:$0xff]
    %v61 = vld [vmem:[%s2] sm:$0x1]
    %v62 = vld [vmem:[%s3] sm:$0x1]
    %vm63 = vcmp.ne.f32.partialorder %v62, 0.0
    %v65 = vlaneseq
    %v66 = vshrl.u32 %v65, 7
    %v67 = vsub.s32 0, %v66
    %v68 = vrot.slane %v61, %v67
    %70 = vmatprep.subr.mxu0 0.0
    %71 = vmatpush1.msra.mxu0 %v60
    %72 = vmatprep.subr.mxu0 0.0
    %73 = vmatpush1.msra.mxu0 %v59
    %74 = vmatprep.subr.mxu0 0.0
    %75 = vmatpush1.msra.mxu0 %v58
    %76 = vmatprep.subr.mxu0 0.0
    %77 = vmatpush1.msra.mxu0 %v57
    %78 = vmatprep.subr.mxu0 0.0
    %79 = vmatpush1.msra.mxu0 %v56
    %80 = vmatprep.subr.mxu0 0.0
    %81 = vmatpush1.msra.mxu0 %v55
    %82 = vmatprep.subr.mxu0 0.0
    %83 = vmatpush1.msra.mxu0 %v54
    %84 = vmatprep.subr.mxu0 0.0
    %85 = vmatpush1.msra.mxu0 %v53
    %86 = vmatprep.subr.mxu0 0.0
    %87 = vmatpush1.msra.mxu0 %v52
    %88 = vmatprep.subr.mxu0 0.0
    %89 = vmatpush1.msra.mxu0 %v51
    %90 = vmatprep.subr.mxu0 0.0
    %91 = vmatpush1.msra.mxu0 %v50
    %92 = vmatprep.subr.mxu0 0.0
    %93 = vmatpush1.msra.mxu0 %v49
    %94 = vmatprep.subr.mxu0 0.0
    %95 = vmatpush1.msra.mxu0 %v48
    %96 = vmatprep.subr.mxu0 0.0
    %97 = vmatpush1.msra.mxu0 %v47
    %98 = vmatprep.subr.mxu0 0.0
    %99 = vmatpush1.msra.mxu0 %v46
    %100 = vmatprep.subr.mxu0 0.0
    %101 = vmatpush1.msra.mxu0 %v45
    %102 = vmatprep.subr.mxu0 0.0
    %103 = vmatpush2.msra.mxu0 0.0
    %104 = vmatprep.subr.mxu0 0.0
    %105 = vmatpush2.msra.mxu0 0.0
    %106 = vmatprep.subr.mxu0 0.0
    %107 = vmatpush2.msra.mxu0 0.0
    %108 = vmatprep.subr.mxu0 0.0
    %109 = vmatpush2.msra.mxu0 0.0
    %110 = vmatprep.subr.mxu0 0.0
    %111 = vmatpush2.msra.mxu0 0.0
    %112 = vmatprep.subr.mxu0 0.0
    %113 = vmatpush2.msra.mxu0 0.0
    %114 = vmatprep.subr.mxu0 0.0
    %115 = vmatpush2.msra.mxu0 0.0
    %116 = vmatprep.subr.mxu0 0.0
    %117 = vmatpush2.msra.mxu0 0.0
    %118 = vmatprep.subr.mxu0 0.0
    %119 = vmatpush2.msra.mxu0 0.0
    %120 = vmatprep.subr.mxu0 0.0
    %121 = vmatpush2.msra.mxu0 0.0
    %122 = vmatprep.subr.mxu0 0.0
    %123 = vmatpush2.msra.mxu0 0.0
    %124 = vmatprep.subr.mxu0 0.0
    %125 = vmatpush2.msra.mxu0 0.0
    %126 = vmatprep.subr.mxu0 0.0
    %127 = vmatpush2.msra.mxu0 0.0
    %128 = vmatprep.subr.mxu0 0.0
    %129 = vmatpush2.msra.mxu0 0.0
    %130 = vmatprep.subr.mxu0 0.0
    %131 = vmatpush2.msra.mxu0 0.0
    %132 = vmatprep.subr.mxu0 0.0
    %133 = vmatpush2.msra.mxu0 0.0
    %134 = vmatprep.mubr.f32.mxu0 0.0
    %135 = vmatmul.mubr.f32.gmra.mxu0 %v44
    %v136 = vpop.f32.mrf.mxu0
    %v137 = vadd.f32 %v68, %v136
    %v138 = vpop.f32.mrf.mxu0
    %139 = vdwg.mxu0
    %v140 = vsel %vm63, 1, 0
    %v141 = vlaneseq
    %v142 = vshrl.u32 %v141, 7
    %v143 = vsub.s32 0, %v142
    %v144 = vrot.slane %v140, %v143
    %vm145 = vcmp.eq.s32.totalorder %v144, 1
    %v146 = vsel %vm145, %v137, -inf
    %147 = vmax.xlane.f32.xlu0 %v146
    %v148 = vpop.xlane.xlu0 %147
    %v149 = vsub.f32 %v137, %v148
    %v150 = vsel %vm145, %v149, 0.0
    %v151 = vmul.f32 %v150, 1.442695
    %v152 = vpow.pop %v151
    %v153 = vsel %vm145, %v152, 0.0
    %154 = vadd.xlane.f32.xlu0 %v153
    %v155 = vpop.xlane.xlu0 %154
    %v156 = vrcp.pop %v155
    %v157 = vmul.f32 %v152, %v156
    %v158 = vsel %vm145, %v157, %v137
    %159 = vst [vmem:[#allocation7] sm:$0xff] %v158
    // Predicated region
    $region26: #{tpu_custom_call.1} parent=1 // pred_check
      _
    $region27: #{tpu_custom_call.1} parent=1 // pred_check_branch
      %161 = sbr.rel (0) target = $region29
    $region28: #{tpu_custom_call.1} parent=1 // pred_region
      %s163 = ssub.s32 128, 128
      %164 = vsyncadd [#allocation4], %s163
      %s166 = sshll.u32 [#allocation7], 4
      %s167 = int_to_ptr.vmem [resolvable:$true] %s166
      %169 = dma.vmem_to_hbm [thread:$0]  %s167, 128, %s4, [#allocation4]
    $region29: #{tpu_custom_call.1} parent=1 // pred_fallthru
      _
    // Predicated region
    $region30: #{tpu_custom_call.1} parent=1 // pred_check
      _
    $region31: #{tpu_custom_call.1} parent=1 // pred_check_branch
      %171 = sbr.rel (0) target = $region33
    $region32: #{tpu_custom_call.1} parent=1 // pred_region
      %172 = dma.done [#allocation4], 128
    $region33: #{tpu_custom_call.1} parent=1 // pred_fallthru
      _
    %173 = vsyncpa [#allocation3], 1
    %174 = vsyncpa [#allocation6], 1
    %175 = vsyncpa [#allocation4], 1

</llo_original>
